<compile_context>
chip_gen: v7x
topology: tpu7x:2x2x1
jax: 0.10.0
libtpu: 0.0.40
codegen_flags: <defaults>
</compile_context>

<pallas_src>
import functools
import math

import jax
import jax.numpy as jnp
from jax import lax
from jax.experimental import pallas as pl
from jax.experimental.pallas import tpu as pltpu


def _round_up(x, m):
    return (x + m - 1) // m * m


def _layernorm_kernel(x_ref, g_ref, b_ref, o_ref, *, eps):
    # x_ref: (tm, D)   g_ref / b_ref: (1, D)   o_ref: (tm, D)
    x = x_ref[...].astype(jnp.float32)
    d = x.shape[-1]
    mean = jnp.mean(x, axis=-1, keepdims=True)
    diff = x - mean
    # torch.std defaults to the unbiased estimator (divide by N-1).
    var = jnp.sum(diff * diff, axis=-1, keepdims=True) * (1.0 / (d - 1))
    inv = lax.rsqrt(var + eps)                       # EUP rsqrt (free slot)
    y = diff * inv
    g = g_ref[...].astype(jnp.float32)
    b = b_ref[...].astype(jnp.float32)
    o_ref[...] = (g * y + b).astype(o_ref.dtype)


def layer_norm(x, gamma, beta, *, eps=1e-6, tile_m=256):
    """LayerNorm over the last axis.  x: (..., D); gamma, beta: (D,)."""
    orig_shape = x.shape
    D = orig_shape[-1]
    n_tok = math.prod(orig_shape[:-1]) if len(orig_shape) > 1 else 1
    x2d = x.reshape(n_tok, D)

    # Sublane pack: 8 rows for 4-byte dtypes, 16 for 2-byte, 32 for 1-byte.
    pack = {4: 8, 2: 16, 1: 32}.get(jnp.dtype(x.dtype).itemsize, 8)
    tm = min(_round_up(tile_m, pack), _round_up(n_tok, pack))
    n_pad = _round_up(n_tok, tm)
    if n_pad != n_tok:
        # Padded rows are normalized too (eps keeps them finite) and are
        # sliced away below, so correctness is unaffected.
        x2d = jnp.pad(x2d, ((0, n_pad - n_tok), (0, 0)))

    g2d = gamma.reshape(1, D)
    b2d = beta.reshape(1, D)

    grid = (n_pad // tm,)
    itemsize = jnp.dtype(x.dtype).itemsize
    cost = pl.CostEstimate(
        flops=8 * n_pad * D,
        transcendentals=n_pad,
        bytes_accessed=(2 * n_pad * D + 2 * D) * itemsize,
    )

    out2d = pl.pallas_call(
        functools.partial(_layernorm_kernel, eps=float(eps)),
        out_shape=jax.ShapeDtypeStruct((n_pad, D), x.dtype),
        grid_spec=pltpu.PrefetchScalarGridSpec(
            num_scalar_prefetch=0,
            grid=grid,
            in_specs=[
                pl.BlockSpec((tm, D), lambda i: (i, 0)),
                pl.BlockSpec((1, D), lambda i: (0, 0)),
                pl.BlockSpec((1, D), lambda i: (0, 0)),
            ],
            out_specs=pl.BlockSpec((tm, D), lambda i: (i, 0)),
        ),
        compiler_params=pltpu.CompilerParams(
            dimension_semantics=("parallel",),
            vmem_limit_bytes=64 * 1024 * 1024,
        ),
        cost_estimate=cost,
    )(x2d, g2d, b2d)

    return out2d[:n_tok].reshape(orig_shape)


def _layer_norm_ref(x, gamma, beta, eps=1e-6):
    x32 = x.astype(jnp.float32)
    mean = x32.mean(-1, keepdims=True)
    var = ((x32 - mean) ** 2).sum(-1, keepdims=True) / (x.shape[-1] - 1)
    y = (x32 - mean) / jnp.sqrt(var + eps)
    return (gamma * y + beta).astype(x.dtype)


if __name__ == "__main__":
    key = jax.random.PRNGKey(0)
    k_x, k_g, k_b, k_x2 = jax.random.split(key, 4)

    # Small shape consistent with the transformer module: batch=2, seq=8,
    # features=128 (lane-dense, multiple of 128 per the review).
    B, S, D = 2, 8, 128
    x = jax.random.normal(k_x, (B, S, D), jnp.float32)
    gamma = 1.0 + 0.1 * jax.random.normal(k_g, (D,), jnp.float32)
    beta = 0.1 * jax.random.normal(k_b, (D,), jnp.float32)

    out = layer_norm(x, gamma, beta)
    out = jax.block_until_ready(out)
    ref = _layer_norm_ref(x, gamma, beta)
    assert out.shape == x.shape
    assert jnp.allclose(out, ref, atol=1e-5, rtol=1e-5)

    # Second check: enough tokens for a multi-step parallel grid (pipelining,
    # both v7x TensorCores) plus a token count that is not a tile multiple.
    x2 = jax.random.normal(k_x2, (4, 300, D), jnp.float32)
    out2 = jax.block_until_ready(layer_norm(x2, gamma, beta, tile_m=256))
    ref2 = _layer_norm_ref(x2, gamma, beta)
    assert out2.shape == x2.shape
    assert jnp.allclose(out2, ref2, atol=1e-5, rtol=1e-5)

    print("KERNEL_OK")
</pallas_src>

<mosaic_0001>
module attributes {stable_mosaic.version = 11 : i64} {
  func.func @_layernorm_kernel(%arg0: i32, %arg1: memref<16x128xf32, #tpu.memory_space<vmem>>, %arg2: memref<1x128xf32, #tpu.memory_space<vmem>>, %arg3: memref<1x128xf32, #tpu.memory_space<vmem>>, %arg4: memref<16x128xf32, #tpu.memory_space<vmem>>) attributes {dimension_semantics = [#tpu.dimension_semantics<parallel>], iteration_bounds = array<i64: 1>, scalar_prefetch = 0 : i64, scratch_operands = 0 : i64, tpu.core_type = #tpu.core_type<tc>, window_params = [{transform_indices = @transform_0, window_bounds = array<i64: 16, 128>}, {pipeline_mode = #tpu.pipeline_mode<synchronous>, transform_indices = @transform_1, window_bounds = array<i64: 1, 128>}, {pipeline_mode = #tpu.pipeline_mode<synchronous>, transform_indices = @transform_2, window_bounds = array<i64: 1, 128>}, {transform_indices = @transform_3, window_bounds = array<i64: 16, 128>}]} {
    %c0 = arith.constant 0 : index
    %c0_0 = arith.constant 0 : index
    %0 = vector.load %arg1[%c0, %c0_0] : memref<16x128xf32, #tpu.memory_space<vmem>>, vector<16x128xf32>
    %cst = arith.constant dense<0.000000e+00> : vector<16xf32>
    %1 = vector.multi_reduction <add>, %0, %cst [1] : vector<16x128xf32> to vector<16xf32>
    %2 = vector.shape_cast %1 : vector<16xf32> to vector<16x1xf32>
    %cst_1 = arith.constant 1.280000e+02 : f32
    %3 = vector.broadcast %cst_1 : f32 to vector<16x1xf32>
    %4 = arith.divf %2, %3 : vector<16x1xf32>
    %5 = vector.broadcast %4 : vector<16x1xf32> to vector<16x128xf32>
    %6 = arith.subf %0, %5 : vector<16x128xf32>
    %7 = arith.mulf %6, %6 : vector<16x128xf32>
    %cst_2 = arith.constant dense<0.000000e+00> : vector<16xf32>
    %8 = vector.multi_reduction <add>, %7, %cst_2 [1] : vector<16x128xf32> to vector<16xf32>
    %9 = vector.shape_cast %8 : vector<16xf32> to vector<16x1xf32>
    %cst_3 = arith.constant 0.00787401571 : f32
    %10 = vector.broadcast %cst_3 : f32 to vector<16x1xf32>
    %11 = arith.mulf %9, %10 : vector<16x1xf32>
    %cst_4 = arith.constant 9.99999997E-7 : f32
    %12 = vector.broadcast %cst_4 : f32 to vector<16x1xf32>
    %13 = arith.addf %11, %12 : vector<16x1xf32>
    %14 = math.rsqrt %13 : vector<16x1xf32>
    %15 = vector.broadcast %14 : vector<16x1xf32> to vector<16x128xf32>
    %16 = arith.mulf %6, %15 : vector<16x128xf32>
    %c0_5 = arith.constant 0 : index
    %c0_6 = arith.constant 0 : index
    %17 = vector.load %arg2[%c0_5, %c0_6] : memref<1x128xf32, #tpu.memory_space<vmem>>, vector<1x128xf32>
    %c0_7 = arith.constant 0 : index
    %c0_8 = arith.constant 0 : index
    %18 = vector.load %arg3[%c0_7, %c0_8] : memref<1x128xf32, #tpu.memory_space<vmem>>, vector<1x128xf32>
    %19 = vector.broadcast %17 : vector<1x128xf32> to vector<16x128xf32>
    %20 = arith.mulf %19, %16 : vector<16x128xf32>
    %21 = vector.broadcast %18 : vector<1x128xf32> to vector<16x128xf32>
    %22 = arith.addf %20, %21 : vector<16x128xf32>
    %c0_9 = arith.constant 0 : index
    %c0_10 = arith.constant 0 : index
    %23 = vector.load %arg4[%c0_9, %c0_10] : memref<16x128xf32, #tpu.memory_space<vmem>>, vector<16x128xf32>
    tpu.vector_store %arg4[%c0_9, %c0_10], %22 {strides = array<i32>} : memref<16x128xf32, #tpu.memory_space<vmem>>, vector<16x128xf32>,
    return
  }
  func.func @transform_0(%arg0: i32) -> (i32, i32) {
    %c0_i32 = arith.constant 0 : i32
    %c0_i32_0 = arith.constant 0 : i32
    return %arg0, %c0_i32 : i32, i32
  }
  func.func @transform_1(%arg0: i32) -> (i32, i32) {
    %c0_i32 = arith.constant 0 : i32
    %c0_i32_0 = arith.constant 0 : i32
    %c0_i32_1 = arith.constant 0 : i32
    return %c0_i32, %c0_i32_0 : i32, i32
  }
  func.func @transform_2(%arg0: i32) -> (i32, i32) {
    %c0_i32 = arith.constant 0 : i32
    %c0_i32_0 = arith.constant 0 : i32
    %c0_i32_1 = arith.constant 0 : i32
    return %c0_i32, %c0_i32_0 : i32, i32
  }
  func.func @transform_3(%arg0: i32) -> (i32, i32) {
    %c0_i32 = arith.constant 0 : i32
    %c0_i32_0 = arith.constant 0 : i32
    return %arg0, %c0_i32 : i32, i32
  }
}

</mosaic_0001>

<llo_original>
// kernel: tpu_custom_call.1
$region0: #{tpu_custom_call.1}
  #allocation0 [shape = 'u32[]', space=smem, size = 0x4, offset = 0x4, fixed_abs, tag = 'smem constant byte address 0x4 - core index']
  #allocation1 [shape = 'u32[144,128]{1,0:T(1,128)}', space=vmem, size = 0x12000, scoped, tag = 'internal scratch']
  %s0 = inlined_call_operand.hbm [shape: f32[16,128], index: 0, kind: input, shape index: {}]
  %s1 = inlined_call_operand.hbm [shape: f32[1,128], index: 1, kind: input, shape index: {}]
  %s2 = inlined_call_operand.hbm [shape: f32[1,128], index: 2, kind: input, shape index: {}]
  %s3 = inlined_call_operand.hbm [shape: f32[16,128], index: 3, kind: output, shape index: {}]
  %s4 = sld [smem:[#allocation0]]
  $region34: #{tpu_custom_call.1} parent=0
    _
  %s6 = ssub.s32 1, %s4
  %s7 = scalar_select 0, %s6, %s4
  $region1: #{tpu_custom_call.1} parent=0
    #allocation2 [shape = 'u8[8192]{0}', space=vmem, size = 0x2000, scoped, tag = 'input window, operand 0, single buffered']
    #allocation3 [shape = 's32[1]{0}', space=sflag, size = 0x4, scoped, tag = 'scoped memory for tpu_custom_call.1']
    #allocation4 [shape = 's32[1]{0}', space=sflag, size = 0x4, scoped, tag = 'scoped memory for tpu_custom_call.1']
    #allocation5 [shape = 'u8[512]{0}', space=vmem, size = 0x400, scoped, tag = 'input window, operand 1, single buffered']
    #allocation6 [shape = 's32[1]{0}', space=sflag, size = 0x4, scoped, tag = 'scoped memory for tpu_custom_call.1']
    #allocation7 [shape = 'u8[512]{0}', space=vmem, size = 0x400, scoped, tag = 'input window, operand 2, single buffered']
    #allocation8 [shape = 'u8[8192]{0}', space=vmem, size = 0x2000, scoped, tag = 'output window, operand 0, single buffered']
    %8 = vsyncpa [#allocation3], 0
    %9 = vsyncpa [#allocation6], 0
    %10 = vsyncpa [#allocation4], 0
    // Predicated region
    $region2: #{tpu_custom_call.1} parent=1 // pred_check
      _
    $region3: #{tpu_custom_call.1} parent=1 // pred_check_branch
      %12 = sbr.rel (0) target = $region5
    $region4: #{tpu_custom_call.1} parent=1 // pred_region
      %s14 = ssub.s32 256, 256
      %15 = vsyncadd [#allocation3], %s14
      %s16 = sshll.u32 [#allocation2], 4
      %s17 = int_to_ptr.vmem [resolvable:$true] %s16
      %22 = dma.hbm_to_vmem [thread:$0]  %s0, 256, %s17, [#allocation3], 128, 128, 8
    $region5: #{tpu_custom_call.1} parent=1 // pred_fallthru
      _
    // Predicated region
    $region6: #{tpu_custom_call.1} parent=1 // pred_check
      _
    $region7: #{tpu_custom_call.1} parent=1 // pred_check_branch
      %24 = sbr.rel (0) target = $region9
    $region8: #{tpu_custom_call.1} parent=1 // pred_region
      %s26 = ssub.s32 16, 16
      %27 = vsyncadd [#allocation6], %s26
      %s29 = sshll.u32 [#allocation5], 4
      %s30 = int_to_ptr.vmem [resolvable:$true] %s29
      %32 = dma.hbm_to_vmem [thread:$0]  %s1, 16, %s30, [#allocation6]
    $region9: #{tpu_custom_call.1} parent=1 // pred_fallthru
      _
    // Predicated region
    $region10: #{tpu_custom_call.1} parent=1 // pred_check
      _
    $region11: #{tpu_custom_call.1} parent=1 // pred_check_branch
      %34 = sbr.rel (0) target = $region13
    $region12: #{tpu_custom_call.1} parent=1 // pred_region
      %s36 = ssub.s32 16, 16
      %37 = vsyncadd [#allocation6], %s36
      %s39 = sshll.u32 [#allocation7], 4
      %s40 = int_to_ptr.vmem [resolvable:$true] %s39
      %42 = dma.hbm_to_vmem [thread:$0]  %s2, 16, %s40, [#allocation6]
    $region13: #{tpu_custom_call.1} parent=1 // pred_fallthru
      _
    // Predicated region
    $region14: #{tpu_custom_call.1} parent=1 // pred_check
      _
    $region15: #{tpu_custom_call.1} parent=1 // pred_check_branch
      %44 = sbr.rel (0) target = $region17
    $region16: #{tpu_custom_call.1} parent=1 // pred_region
      %45 = dma.done [#allocation3], 256
    $region17: #{tpu_custom_call.1} parent=1 // pred_fallthru
      _
    // Predicated region
    $region18: #{tpu_custom_call.1} parent=1 // pred_check
      _
    $region19: #{tpu_custom_call.1} parent=1 // pred_check_branch
      %47 = sbr.rel (0) target = $region21
    $region20: #{tpu_custom_call.1} parent=1 // pred_region
      %48 = dma.done [#allocation6], 16
    $region21: #{tpu_custom_call.1} parent=1 // pred_fallthru
      _
    // Predicated region
    $region22: #{tpu_custom_call.1} parent=1 // pred_check
      _
    $region23: #{tpu_custom_call.1} parent=1 // pred_check_branch
      %50 = sbr.rel (0) target = $region25
    $region24: #{tpu_custom_call.1} parent=1 // pred_region
      %51 = dma.done [#allocation6], 16
    $region25: #{tpu_custom_call.1} parent=1 // pred_fallthru
      _
    %v52 = vld [vmem:[#allocation2] sm:$0xff]
    %v53 = vld [vmem:[#allocation2 + $0x8] sm:$0xff]
    %54 = vadd.xlane.f32.xlu0 %v52
    %v55 = vpop.xlane.xlu0 %54
    %56 = vadd.xlane.f32.xlu0 %v53
    %v57 = vpop.xlane.xlu0 %56
    %v58 = vrcp.pop 128.0
    %v59 = vmul.f32 %v55, %v58
    %v60 = vmul.f32 %v57, %v58
    %v61 = vsub.f32 %v52, %v59
    %v62 = vsub.f32 %v53, %v60
    %v63 = vmul.f32 %v61, %v61
    %v64 = vmul.f32 %v62, %v62
    %65 = vadd.xlane.f32.xlu0 %v63
    %v66 = vpop.xlane.xlu0 %65
    %67 = vadd.xlane.f32.xlu0 %v64
    %v68 = vpop.xlane.xlu0 %67
    %v69 = vmul.f32 %v66, 0.007874016
    %v70 = vmul.f32 %v68, 0.007874016
    %v71 = vadd.f32 %v69, 1e-06
    %v72 = vadd.f32 %v70, 1e-06
    %v73 = vrsqrt.pop %v71
    %v74 = vrsqrt.pop %v72
    %v75 = vmul.f32 %v61, %v73
    %v76 = vmul.f32 %v62, %v74
    %v77 = vld [vmem:[#allocation5] sm:$0x1]
    %v78 = vld [vmem:[#allocation7] sm:$0x1]
    %v80 = vlaneseq
    %v81 = vshrl.u32 %v80, 7
    %v82 = vsub.s32 0, %v81
    %v83 = vrot.slane %v77, %v82
    %v85 = vmul.f32 %v83, %v75
    %v86 = vmul.f32 %v83, %v76
    %v88 = vlaneseq
    %v89 = vshrl.u32 %v88, 7
    %v90 = vsub.s32 0, %v89
    %v91 = vrot.slane %v78, %v90
    %v93 = vadd.f32 %v85, %v91
    %v94 = vadd.f32 %v86, %v91
    %95 = vst [vmem:[#allocation8] sm:$0xff] %v93
    %96 = vst [vmem:[#allocation8 + $0x8] sm:$0xff] %v94
    // Predicated region
    $region26: #{tpu_custom_call.1} parent=1 // pred_check
      _
    $region27: #{tpu_custom_call.1} parent=1 // pred_check_branch
      %98 = sbr.rel (0) target = $region29
    $region28: #{tpu_custom_call.1} parent=1 // pred_region
      %s100 = ssub.s32 256, 256
      %101 = vsyncadd [#allocation4], %s100
      %s102 = sshll.u32 [#allocation8], 4
      %s103 = int_to_ptr.vmem [resolvable:$true] %s102
      %108 = dma.vmem_to_hbm [thread:$0]  %s103, 256, %s3, [#allocation4], 128, 128, 8
    $region29: #{tpu_custom_call.1} parent=1 // pred_fallthru
      _
    // Predicated region
    $region30: #{tpu_custom_call.1} parent=1 // pred_check
      _
    $region31: #{tpu_custom_call.1} parent=1 // pred_check_branch
      %110 = sbr.rel (0) target = $region33
    $region32: #{tpu_custom_call.1} parent=1 // pred_region
      %111 = dma.done [#allocation4], 256
    $region33: #{tpu_custom_call.1} parent=1 // pred_fallthru
      _
    %112 = vsyncpa [#allocation3], 1
    %113 = vsyncpa [#allocation6], 1
    %114 = vsyncpa [#allocation4], 1

</llo_original>
